<compile_context>
chip_gen: v7x
topology: tpu7x:2x2x1
jax: 0.10.0
libtpu: 0.0.40
codegen_flags: <defaults>
</compile_context>

<pallas_src>
import functools

import jax
import jax.numpy as jnp
from jax import lax
from jax.experimental import pallas as pl
from jax.experimental.pallas import tpu as pltpu

# TODO(synk): label_dict_from_config_file('hand_gesture.yaml') is unavailable;
# num_class is fixed to a deterministic value consistent with a hand-gesture config.
NUM_CLASS = 6

_MAX_TILE_ROWS = 512            # large row tile: amortizes per-grid-step overhead
_GOLDEN_I32 = -1640531527       # 0x9E3779B9 as int32 (Weyl/golden-ratio seed mix)
_H1 = 0x7FEB352D                # lowbias32 hash constants
_H2 = 0x846CA68B


def _round_up(x, m):
    return ((x + m - 1) // m) * m


def _rand_uniform_kernel(seed_ref, out_ref):
    """Fill out_ref (tile_rows, n_cols) with uniform [0, 1) float32."""
    tile_rows, n_cols = out_ref.shape
    row0 = pl.program_id(0) * tile_rows

    # Unique per-element counter, unique across grid tiles via the global row.
    rows = lax.broadcasted_iota(jnp.int32, (tile_rows, n_cols), 0) + row0
    cols = lax.broadcasted_iota(jnp.int32, (tile_rows, n_cols), 1)
    ctr = (rows * n_cols + cols).astype(jnp.uint32)

    # Seed mixing on the scalar path (wraparound int32 mul == uint32 mul bits).
    smix = (seed_ref[0] * jnp.int32(_GOLDEN_I32)).astype(jnp.uint32)

    # lowbias32 integer finalizer -- pure VALU work.
    x = ctr + smix
    x = x ^ (x >> jnp.uint32(16))
    x = x * jnp.uint32(_H1)
    x = x ^ (x >> jnp.uint32(15))
    x = x * jnp.uint32(_H2)
    x = x ^ (x >> jnp.uint32(16))

    # Mantissa trick: top 23 random bits -> float in [1, 2), subtract 1 -> [0, 1).
    mant = (x >> jnp.uint32(9)) | jnp.uint32(0x3F800000)
    out_ref[...] = lax.bitcast_convert_type(mant, jnp.float32) - jnp.float32(1.0)


@functools.partial(jax.jit, static_argnames=("batch", "num_class"))
def _rand_logits(seed, batch, num_class):
    # One tile covers small batches; large batches get a row grid with 512-row
    # tiles (tiny VMEM footprint: 512 * num_class * 4 B * 2 buffers).
    tile_rows = min(_MAX_TILE_ROWS, _round_up(batch, 8))
    padded_rows = _round_up(batch, tile_rows)
    grid = (padded_rows // tile_rows,)

    out = pl.pallas_call(
        _rand_uniform_kernel,
        out_shape=jax.ShapeDtypeStruct((padded_rows, num_class), jnp.float32),
        grid=grid,
        in_specs=[pl.BlockSpec(memory_space=pltpu.SMEM)],
        out_specs=pl.BlockSpec((tile_rows, num_class), lambda i: (i, 0)),
        compiler_params=pltpu.CompilerParams(
            dimension_semantics=("parallel",)),
    )(seed)

    if padded_rows != batch:
        out = out[:batch]
    return out


class RandomClassifier:
    """JAX/Pallas port of the PyTorch RandomClassifier."""

    def __init__(self, key=None):
        self.num_class = NUM_CLASS
        # nn.Linear(63, 128): parameter parity only (unused in forward).
        if key is None:
            key = jax.random.PRNGKey(42)
        wk, bk = jax.random.split(key)
        bound = 1.0 / jnp.sqrt(63.0)
        self.dummy_w = jax.random.uniform(wk, (128, 63), jnp.float32, -bound, bound)
        self.dummy_b = jax.random.uniform(bk, (128,), jnp.float32, -bound, bound)
        self._call_count = 0

    def __call__(self, x):
        # forward(): torch.rand(x.shape[0], self.num_class)
        batch = int(x.shape[0])
        seed = jnp.asarray([self._call_count], dtype=jnp.int32)
        self._call_count += 1
        return _rand_logits(seed, batch, self.num_class)

    def predict(self, x, threshold=0.8):
        logits = self(x)
        probs = jax.nn.softmax(logits, axis=1)
        chosen = jnp.argmax(probs, axis=1)
        chosen_prob = jnp.max(probs, axis=1)
        return jnp.where(chosen_prob > threshold, chosen, -1)

    def predict_with_known_class(self, x):
        logits = self(x)
        # softmax is monotonic: argmax(softmax(x)) == argmax(x).
        return jnp.argmax(logits, axis=1)

    def score(self, logits):
        return -jnp.max(logits, axis=1)


if __name__ == "__main__":
    key = jax.random.PRNGKey(0)
    # Input: batch of 2 hand-landmark feature vectors (21 landmarks * 3 coords).
    x = jax.random.normal(key, (2, 63), dtype=jnp.float32)

    model = RandomClassifier(key)
    logits = jax.block_until_ready(model(x))
    assert logits.shape == (2, NUM_CLASS), logits.shape
    assert logits.dtype == jnp.float32, logits.dtype
    assert bool(jnp.all(logits >= 0.0)) and bool(jnp.all(logits < 1.0))

    # Second call uses a new seed -> different randoms.
    logits2 = jax.block_until_ready(model(x))
    assert not bool(jnp.allclose(logits, logits2))

    # Batch larger than 8 exercises padding / the row grid correctly.
    xb = jax.random.normal(key, (37, 63), dtype=jnp.float32)
    lb = jax.block_until_ready(model(xb))
    assert lb.shape == (37, NUM_CLASS), lb.shape
    assert bool(jnp.all(lb >= 0.0)) and bool(jnp.all(lb < 1.0))

    preds = jax.block_until_ready(model.predict_with_known_class(x))
    assert preds.shape == (2,)

    print("KERNEL_OK")
</pallas_src>

<mosaic_0001>
module attributes {stable_mosaic.version = 11 : i64} {
  func.func @_rand_uniform_kernel(%arg0: i32, %arg1: memref<1xi32, #tpu.memory_space<smem>>, %arg2: memref<8x6xf32, #tpu.memory_space<vmem>>) attributes {dimension_semantics = [#tpu.dimension_semantics<parallel>], iteration_bounds = array<i64: 1>, scalar_prefetch = 0 : i64, scratch_operands = 0 : i64, tpu.core_type = #tpu.core_type<tc>, window_params = [{transform_indices = @transform_0, window_bounds = array<i64: 1>}, {transform_indices = @transform_1, window_bounds = array<i64: 8, 6>}]} {
    %c8_i32 = arith.constant 8 : i32
    %0 = arith.muli %arg0, %c8_i32 : i32
    %1 = tpu.iota {dimensions = array<i32: 0>} : vector<8x6xi32>
    %2 = vector.broadcast %0 : i32 to vector<8x6xi32>
    %3 = arith.addi %1, %2 : vector<8x6xi32>
    %4 = tpu.iota {dimensions = array<i32: 1>} : vector<8x6xi32>
    %c6_i32 = arith.constant 6 : i32
    %5 = vector.broadcast %c6_i32 : i32 to vector<8x6xi32>
    %6 = arith.muli %3, %5 : vector<8x6xi32>
    %7 = arith.addi %6, %4 : vector<8x6xi32>
    %c0 = arith.constant 0 : index
    %8 = memref.load %arg1[%c0] : memref<1xi32, #tpu.memory_space<smem>>
    %c-1640531527_i32 = arith.constant -1640531527 : i32
    %9 = arith.muli %8, %c-1640531527_i32 : i32
    %10 = vector.broadcast %9 : i32 to vector<8x6xi32>
    %11 = arith.addi %7, %10 : vector<8x6xi32>
    %c16_i32 = arith.constant 16 : i32
    %12 = vector.broadcast %c16_i32 : i32 to vector<8x6xi32>
    %13 = arith.shrui %11, %12 : vector<8x6xi32>
    %14 = arith.xori %11, %13 : vector<8x6xi32>
    %c2146121005_i32 = arith.constant 2146121005 : i32
    %15 = vector.broadcast %c2146121005_i32 : i32 to vector<8x6xi32>
    %16 = arith.muli %14, %15 : vector<8x6xi32>
    %c15_i32 = arith.constant 15 : i32
    %17 = vector.broadcast %c15_i32 : i32 to vector<8x6xi32>
    %18 = arith.shrui %16, %17 : vector<8x6xi32>
    %19 = arith.xori %16, %18 : vector<8x6xi32>
    %c-2073254261_i32 = arith.constant -2073254261 : i32
    %20 = vector.broadcast %c-2073254261_i32 : i32 to vector<8x6xi32>
    %21 = arith.muli %19, %20 : vector<8x6xi32>
    %c16_i32_0 = arith.constant 16 : i32
    %22 = vector.broadcast %c16_i32_0 : i32 to vector<8x6xi32>
    %23 = arith.shrui %21, %22 : vector<8x6xi32>
    %24 = arith.xori %21, %23 : vector<8x6xi32>
    %c9_i32 = arith.constant 9 : i32
    %25 = vector.broadcast %c9_i32 : i32 to vector<8x6xi32>
    %26 = arith.shrui %24, %25 : vector<8x6xi32>
    %c1065353216_i32 = arith.constant 1065353216 : i32
    %27 = vector.broadcast %c1065353216_i32 : i32 to vector<8x6xi32>
    %28 = arith.ori %26, %27 : vector<8x6xi32>
    %29 = tpu.bitcast %28 : vector<8x6xi32> -> vector<8x6xf32>
    %cst = arith.constant 1.000000e+00 : f32
    %30 = vector.broadcast %cst : f32 to vector<8x6xf32>
    %31 = arith.subf %29, %30 : vector<8x6xf32>
    %c0_1 = arith.constant 0 : index
    %c0_2 = arith.constant 0 : index
    %32 = vector.load %arg2[%c0_1, %c0_2] : memref<8x6xf32, #tpu.memory_space<vmem>>, vector<8x6xf32>
    tpu.vector_store %arg2[%c0_1, %c0_2], %31 {strides = array<i32>} : memref<8x6xf32, #tpu.memory_space<vmem>>, vector<8x6xf32>,
    return
  }
  func.func @transform_0(%arg0: i32) -> i32 {
    %c0_i32 = arith.constant 0 : i32
    %c0_i32_0 = arith.constant 0 : i32
    return %c0_i32 : i32
  }
  func.func @transform_1(%arg0: i32) -> (i32, i32) {
    %c0_i32 = arith.constant 0 : i32
    %c0_i32_0 = arith.constant 0 : i32
    return %arg0, %c0_i32 : i32, i32
  }
}

</mosaic_0001>

<llo_original>
// kernel: _rand_logits.1
$region0: #{_rand_logits.1}
  #allocation0 [shape = 'u32[]', space=smem, size = 0x4, offset = 0x4, fixed_abs, tag = 'smem constant byte address 0x4 - core index']
  #allocation1 [shape = 'u32[144,128]{1,0:T(1,128)}', space=vmem, size = 0x12000, scoped, tag = 'internal scratch']
  #allocation2 [shape = 's32[1]{0:T(128)S(6)}', space=smem, size = 0x200, scoped, tag = 'scoped memory for _rand_logits.1']
  %s0 = inlined_call_operand.<no memory space> [shape: s32[1], index: 0, kind: input, shape index: {}]
  %s1 = inlined_call_operand.vmem [shape: f32[8,6], index: 1, kind: output, shape index: {}]
  %s2 = sld [smem:[#allocation0]]
  $region14: #{_rand_logits.1} parent=0
    _
  %s4 = ssub.s32 1, %s2
  %s5 = scalar_select 0, %s4, %s2
  %6 = sst [smem:[#allocation2]] %s0
  // Predicated region
  $region2: #{_rand_logits.1} parent=0 // pred_check
    _
  $region3: #{_rand_logits.1} parent=0 // pred_check_branch
    %8 = sbr.rel (0) target = $region5
  $region4: #{_rand_logits.1} parent=0 // pred_region
    _
  $region5: #{_rand_logits.1} parent=0 // pred_fallthru
    _
  %s9 = smul.u32 0, 8
  %v10 = vlaneseq
  %v11 = vshrl.u32 %v10, 7
  %v12 = vstv %s9
  %v13 = vadd.s32 %v11, %v12
  %v14 = vlaneseq
  %v15 = vand.u32 %v14, 127
  %v16 = vmul.u32 %v13, 6
  %v17 = vadd.s32 %v16, %v15
  %s18 = sld [smem:[#allocation2]]
  %s19 = smul.u32 %s18, 2654435769
  %v20 = vstv %s19
  %v21 = vadd.s32 %v17, %v20
  %v22 = vshrl.u32 %v21, 16
  %v23 = vxor.u32 %v21, %v22
  %v24 = vmul.u32 %v23, 2146121005
  %v25 = vshrl.u32 %v24, 15
  %v26 = vxor.u32 %v24, %v25
  %v27 = vmul.u32 %v26, 2221713035
  %v28 = vshrl.u32 %v27, 16
  %v29 = vxor.u32 %v27, %v28
  %v30 = vshrl.u32 %v29, 9
  %v31 = vor.u32 %v30, 1065353216
  %v33 = vsub.f32 %v31, 1.0
  %vm34 = vcmask 48128
  %35 = vst.msk [vmem:[%s1] sm:$0xff] %vm34, %v33
  // Predicated region
  $region6: #{_rand_logits.1} parent=0 // pred_check
    _
  $region7: #{_rand_logits.1} parent=0 // pred_check_branch
    %37 = sbr.rel (0) target = $region9
  $region8: #{_rand_logits.1} parent=0 // pred_region
    _
  $region9: #{_rand_logits.1} parent=0 // pred_fallthru
    _
  // Predicated region
  $region10: #{_rand_logits.1} parent=0 // pred_check
    _
  $region11: #{_rand_logits.1} parent=0 // pred_check_branch
    %39 = sbr.rel (0) target = $region13
  $region12: #{_rand_logits.1} parent=0 // pred_region
    _
  $region13: #{_rand_logits.1} parent=0 // pred_fallthru
    _

</llo_original>
